<compile_context>
chip_gen: v7x
topology: tpu7x:2x2x1
jax: 0.10.0
libtpu: 0.0.40
codegen_flags: <defaults>
</compile_context>

<pallas_src>
import functools

import jax
import jax.numpy as jnp
from jax.experimental import pallas as pl
from jax.experimental.pallas import tpu as pltpu

F32 = jnp.float32


# ---------------------------------------------------------------------------
# Kernel: fused global avg/max pool over H*W + per-row scales + sigmoid
#   x block   : (TR, THW)   rows = (b, c) pairs, lanes = H*W chunk
#   gam block : (TR, 2)     [:, 0] = gamma_avg row, [:, 1] = gamma_max row
#   out block : (TR, 1)     written once per row tile (last HW step)
#   scratch   : running sum / running max, (TR, 1) f32
# ---------------------------------------------------------------------------
def _squeeze_kernel(x_ref, gam_ref, out_ref, sum_sc, max_sc, *,
                    inv_hw, hw_total, block_hw, needs_mask):
    s = pl.program_id(1)

    @pl.when(s == 0)
    def _init():
        sum_sc[...] = jnp.zeros_like(sum_sc)
        max_sc[...] = jnp.full_like(max_sc, -jnp.inf)

    x = x_ref[...].astype(F32)                                # (TR, THW)

    if needs_mask:
        # Final HW tile may overrun the array; padded lanes are undefined.
        lane = jax.lax.broadcasted_iota(jnp.int32, x.shape, 1)
        remaining = hw_total - s * block_hw                   # > THW on non-final steps
        valid = lane < remaining
        x_sum = jnp.where(valid, x, 0.0)
        x_max = jnp.where(valid, x, -jnp.inf)
    else:
        x_sum = x
        x_max = x

    sum_sc[...] = sum_sc[...] + jnp.sum(x_sum, axis=-1, keepdims=True)
    max_sc[...] = jnp.maximum(max_sc[...], jnp.max(x_max, axis=-1, keepdims=True))

    @pl.when(s == pl.num_programs(1) - 1)
    def _finalize():
        g = gam_ref[...]                                      # (TR, 2), f32
        avg = sum_sc[...] * inv_hw
        z = g[:, 0:1] * avg + g[:, 1:2] * max_sc[...]
        out_ref[...] = jax.nn.sigmoid(z).astype(out_ref.dtype)


# ---------------------------------------------------------------------------
# Tile picker
# ---------------------------------------------------------------------------
def _pick_tiles(R, HW, elem_bytes, budget_bytes, block_rows=None, block_hw=None):
    """Pick (row_tile, hw_tile) for x viewed as (R, HW)."""
    # Row-tile candidates: 8-aligned divisors of R (sublane-legal), plus R itself.
    divs = [d for d in range(1, R + 1) if R % d == 0]
    divs8 = [d for d in divs if d % 8 == 0]
    row_cands = sorted(set(divs8 + [R]))
    tr_min = row_cands[0]

    # --- HW tile ---
    if block_hw is not None:
        thw = block_hw
    elif tr_min * HW * elem_bytes <= budget_bytes:
        thw = HW                                   # whole reduction axis in one block
    else:
        # Largest 128-multiple that keeps the smallest row tile inside the budget,
        # but never below ~4 KiB of contiguous bytes per DMA row, never above HW.
        cap = budget_bytes // (tr_min * elem_bytes)
        thw = max(128, (cap // 128) * 128)
        thw = max(thw, min(4096 // elem_bytes, (HW // 128) * 128))
        thw = min(thw, (HW // 128) * 128)

    # --- row tile: largest candidate that fits the budget, preferring >= 2 row
    # tiles so the 'parallel' grid axis shards across v7x's two TensorCores.
    if block_rows is not None:
        tr = block_rows
    else:
        fitting = [d for d in row_cands if d * thw * elem_bytes <= budget_bytes] or [tr_min]
        multi = [d for d in fitting if R // d >= 2]
        tr = max(multi) if multi else max(fitting)
    return tr, thw


# ---------------------------------------------------------------------------
# Wrapper
# ---------------------------------------------------------------------------
def squeeze_forward(x_nchw, gamma_avg, gamma_max, *,
                    block_rows=None, block_hw=None, budget_bytes=8 << 20):
    """sigmoid(gamma_avg * avgpool(x) + gamma_max * maxpool(x)); x is NCHW."""
    B, C, H, W = x_nchw.shape
    HW = H * W
    R = B * C
    elem_bytes = x_nchw.dtype.itemsize

    # Zero-copy view: channel-major NCHW -> (rows = (b, c) pairs, lanes = H*W).
    x2d = x_nchw.reshape(R, HW)

    tr, thw = _pick_tiles(R, HW, elem_bytes, budget_bytes,
                          block_rows=block_rows, block_hw=block_hw)
    assert R % tr == 0 and (tr % 8 == 0 or tr == R), \
        "row tile must divide B*C and be 8-aligned (or the full extent)"
    assert thw == HW or thw % 128 == 0, \
        "HW tile must be a multiple of 128 or the full extent"

    grid = (R // tr, pl.cdiv(HW, thw))
    needs_mask = (thw != HW) and (HW % thw != 0)

    # Per-row scales: one (R, 2) operand, f32.
    gam = jnp.stack([jnp.tile(gamma_avg.astype(F32), B),
                     jnp.tile(gamma_max.astype(F32), B)], axis=-1)      # (R, 2)

    kern = functools.partial(_squeeze_kernel, inv_hw=1.0 / float(HW),
                             hw_total=HW, block_hw=thw, needs_mask=needs_mask)

    block_bytes = tr * thw * elem_bytes
    vmem_limit = int(min(64 << 20, max(32 << 20, int(2.5 * block_bytes) + (2 << 20))))

    cost = pl.CostEstimate(
        flops=int(2 * R * HW),          # running sum + running max over every element
        transcendentals=int(R),         # one sigmoid per (b, c)
        bytes_accessed=int(R * HW * elem_bytes + gam.size * 4 + R * 4),
    )

    out2d = pl.pallas_call(
        kern,
        out_shape=jax.ShapeDtypeStruct((R, 1), F32),
        grid=grid,
        in_specs=[
            pl.BlockSpec((tr, thw), lambda r, s: (r, s)),
            pl.BlockSpec((tr, 2), lambda r, s: (r, 0)),
        ],
        out_specs=pl.BlockSpec((tr, 1), lambda r, s: (r, 0)),
        scratch_shapes=[
            pltpu.VMEM((tr, 1), F32),   # running sum
            pltpu.VMEM((tr, 1), F32),   # running max
        ],
        compiler_params=pltpu.CompilerParams(
            dimension_semantics=("parallel", "arbitrary"),
            vmem_limit_bytes=vmem_limit,
        ),
        cost_estimate=cost,
    )(x2d, gam)

    return out2d.reshape(B, C)


# ---------------------------------------------------------------------------
# Pure-JAX reference (mirrors the PyTorch forward)
# ---------------------------------------------------------------------------
def squeeze_reference(x_nchw, gamma_avg, gamma_max):
    xf = x_nchw.astype(F32)
    avg = jnp.mean(xf, axis=(2, 3))
    mx = jnp.max(xf, axis=(2, 3))
    return jax.nn.sigmoid(gamma_avg.astype(F32)[None, :] * avg
                          + gamma_max.astype(F32)[None, :] * mx)


if __name__ == "__main__":
    key = jax.random.PRNGKey(0)

    test_cases = [
        # (B, C, H, W, dtype, block_rows, block_hw)
        (2, 32, 16, 16, jnp.float32, None, None),    # auto tiles, full-HW block, 2 parallel row tiles
        (2, 32, 16, 20, jnp.float32, None, 256),     # HW=320: masked partial final HW tile
        (4, 64, 12, 12, jnp.float32, None, None),    # HW=144: non-128-aligned full-extent block
        (2, 32, 16, 16, jnp.bfloat16, None, 128),    # native bf16 input, multi-step HW reduction
    ]

    for (B, C, H, W, dt, br, bhw) in test_cases:
        key, kx, kg1, kg2 = jax.random.split(key, 4)
        x = jax.random.normal(kx, (B, C, H, W), jnp.float32).astype(dt)
        gamma_avg = jax.random.uniform(kg1, (C,), jnp.float32, 0.5, 1.5)   # LayerScaler (avg)
        gamma_max = jax.random.uniform(kg2, (C,), jnp.float32, 0.5, 1.5)   # LayerScaler (max)

        out = squeeze_forward(x, gamma_avg, gamma_max, block_rows=br, block_hw=bhw)
        out = jax.block_until_ready(out)

        ref = squeeze_reference(x, gamma_avg, gamma_max)
        assert out.shape == (B, C)
        tol = 1e-5 if dt == jnp.float32 else 2e-3
        max_err = float(jnp.max(jnp.abs(out - ref)))
        assert max_err <= tol, ((B, C, H, W, str(dt)), max_err)

    print("KERNEL_OK")
</pallas_src>

<mosaic_0001>
module attributes {stable_mosaic.version = 11 : i64} {
  func.func @_squeeze_kernel(%arg0: i32, %arg1: i32, %arg2: memref<32x256xf32, #tpu.memory_space<vmem>>, %arg3: memref<32x2xf32, #tpu.memory_space<vmem>>, %arg4: memref<32x1xf32, #tpu.memory_space<vmem>>, %arg5: memref<32x1xf32, #tpu.memory_space<vmem>>, %arg6: memref<32x1xf32, #tpu.memory_space<vmem>>) attributes {dimension_semantics = [#tpu.dimension_semantics<parallel>, #tpu.dimension_semantics<arbitrary>], iteration_bounds = array<i64: 2, 1>, scalar_prefetch = 0 : i64, scratch_operands = 2 : i64, tpu.core_type = #tpu.core_type<tc>, window_params = [{transform_indices = @transform_0, window_bounds = array<i64: 32, 256>}, {transform_indices = @transform_1, window_bounds = array<i64: 32, 2>}, {transform_indices = @transform_2, window_bounds = array<i64: 32, 1>}]} {
    %c0_i32 = arith.constant 0 : i32
    %0 = arith.cmpi eq, %arg1, %c0_i32 : i32
    %1 = arith.extui %0 : i1 to i32
    %c0_i32_0 = arith.constant 0 : i32
    %2 = arith.cmpi ne, %1, %c0_i32_0 : i32
    scf.if %2 {
      %cst_13 = arith.constant 0.000000e+00 : f32
      %17 = vector.broadcast %cst_13 : f32 to vector<32x1xf32>
      %c0_14 = arith.constant 0 : index
      %c0_15 = arith.constant 0 : index
      %18 = vector.load %arg5[%c0_14, %c0_15] : memref<32x1xf32, #tpu.memory_space<vmem>>, vector<32x1xf32>
      tpu.vector_store %arg5[%c0_14, %c0_15], %17 {strides = array<i32>} : memref<32x1xf32, #tpu.memory_space<vmem>>, vector<32x1xf32>,
      %cst_16 = arith.constant 0xFF800000 : f32
      %19 = vector.broadcast %cst_16 : f32 to vector<32x1xf32>
      %c0_17 = arith.constant 0 : index
      %c0_18 = arith.constant 0 : index
      %20 = vector.load %arg6[%c0_17, %c0_18] : memref<32x1xf32, #tpu.memory_space<vmem>>, vector<32x1xf32>
      tpu.vector_store %arg6[%c0_17, %c0_18], %19 {strides = array<i32>} : memref<32x1xf32, #tpu.memory_space<vmem>>, vector<32x1xf32>,
    } else {
    }
    %c0 = arith.constant 0 : index
    %c0_1 = arith.constant 0 : index
    %3 = vector.load %arg2[%c0, %c0_1] : memref<32x256xf32, #tpu.memory_space<vmem>>, vector<32x256xf32>
    %c0_2 = arith.constant 0 : index
    %c0_3 = arith.constant 0 : index
    %4 = vector.load %arg5[%c0_2, %c0_3] : memref<32x1xf32, #tpu.memory_space<vmem>>, vector<32x1xf32>
    %cst = arith.constant dense<0.000000e+00> : vector<32xf32>
    %5 = vector.multi_reduction <add>, %3, %cst [1] : vector<32x256xf32> to vector<32xf32>
    %6 = vector.shape_cast %5 : vector<32xf32> to vector<32x1xf32>
    %7 = arith.addf %4, %6 : vector<32x1xf32>
    %c0_4 = arith.constant 0 : index
    %c0_5 = arith.constant 0 : index
    %8 = vector.load %arg5[%c0_4, %c0_5] : memref<32x1xf32, #tpu.memory_space<vmem>>, vector<32x1xf32>
    tpu.vector_store %arg5[%c0_4, %c0_5], %7 {strides = array<i32>} : memref<32x1xf32, #tpu.memory_space<vmem>>, vector<32x1xf32>,
    %c0_6 = arith.constant 0 : index
    %c0_7 = arith.constant 0 : index
    %9 = vector.load %arg6[%c0_6, %c0_7] : memref<32x1xf32, #tpu.memory_space<vmem>>, vector<32x1xf32>
    %cst_8 = arith.constant dense<0xFF800000> : vector<32xf32>
    %10 = vector.multi_reduction <maximumf>, %3, %cst_8 [1] : vector<32x256xf32> to vector<32xf32>
    %11 = vector.shape_cast %10 : vector<32xf32> to vector<32x1xf32>
    %12 = arith.maximumf %9, %11 : vector<32x1xf32>
    %c0_9 = arith.constant 0 : index
    %c0_10 = arith.constant 0 : index
    %13 = vector.load %arg6[%c0_9, %c0_10] : memref<32x1xf32, #tpu.memory_space<vmem>>, vector<32x1xf32>
    tpu.vector_store %arg6[%c0_9, %c0_10], %12 {strides = array<i32>} : memref<32x1xf32, #tpu.memory_space<vmem>>, vector<32x1xf32>,
    %c0_i32_11 = arith.constant 0 : i32
    %14 = arith.cmpi eq, %arg1, %c0_i32_11 : i32
    %15 = arith.extui %14 : i1 to i32
    %c0_i32_12 = arith.constant 0 : i32
    %16 = arith.cmpi ne, %15, %c0_i32_12 : i32
    scf.if %16 {
      %c0_13 = arith.constant 0 : index
      %c0_14 = arith.constant 0 : index
      %17 = vector.load %arg3[%c0_13, %c0_14] : memref<32x2xf32, #tpu.memory_space<vmem>>, vector<32x2xf32>
      %c0_15 = arith.constant 0 : index
      %c0_16 = arith.constant 0 : index
      %18 = vector.load %arg5[%c0_15, %c0_16] : memref<32x1xf32, #tpu.memory_space<vmem>>, vector<32x1xf32>
      %cst_17 = arith.constant 3.906250e-03 : f32
      %19 = vector.broadcast %cst_17 : f32 to vector<32x1xf32>
      %20 = arith.mulf %18, %19 : vector<32x1xf32>
      %21 = vector.extract_strided_slice %17 {offsets = [0, 0], sizes = [32, 1], strides = [1, 1]} : vector<32x2xf32> to vector<32x1xf32>
      %22 = arith.mulf %21, %20 : vector<32x1xf32>
      %23 = vector.extract_strided_slice %17 {offsets = [0, 1], sizes = [32, 1], strides = [1, 1]} : vector<32x2xf32> to vector<32x1xf32>
      %c0_18 = arith.constant 0 : index
      %c0_19 = arith.constant 0 : index
      %24 = vector.load %arg6[%c0_18, %c0_19] : memref<32x1xf32, #tpu.memory_space<vmem>>, vector<32x1xf32>
      %25 = arith.mulf %23, %24 : vector<32x1xf32>
      %26 = arith.addf %22, %25 : vector<32x1xf32>
      %27 = arith.negf %26 : vector<32x1xf32>
      %28 = math.exp %27 : vector<32x1xf32>
      %cst_20 = arith.constant 1.000000e+00 : f32
      %29 = vector.broadcast %cst_20 : f32 to vector<32x1xf32>
      %30 = arith.addf %29, %28 : vector<32x1xf32>
      %31 = arith.divf %29, %30 : vector<32x1xf32>
      %c0_21 = arith.constant 0 : index
      %c0_22 = arith.constant 0 : index
      %32 = vector.load %arg4[%c0_21, %c0_22] : memref<32x1xf32, #tpu.memory_space<vmem>>, vector<32x1xf32>
      tpu.vector_store %arg4[%c0_21, %c0_22], %31 {strides = array<i32>} : memref<32x1xf32, #tpu.memory_space<vmem>>, vector<32x1xf32>,
    } else {
    }
    return
  }
  func.func @transform_0(%arg0: i32, %arg1: i32) -> (i32, i32) {
    %c0_i32 = arith.constant 0 : i32
    return %arg0, %arg1 : i32, i32
  }
  func.func @transform_1(%arg0: i32, %arg1: i32) -> (i32, i32) {
    %c0_i32 = arith.constant 0 : i32
    %c0_i32_0 = arith.constant 0 : i32
    return %arg0, %c0_i32 : i32, i32
  }
  func.func @transform_2(%arg0: i32, %arg1: i32) -> (i32, i32) {
    %c0_i32 = arith.constant 0 : i32
    %c0_i32_0 = arith.constant 0 : i32
    return %arg0, %c0_i32 : i32, i32
  }
}

</mosaic_0001>

<llo_original>
// kernel: tpu_custom_call.1
$region0: #{tpu_custom_call.1}
  #allocation0 [shape = 'u32[]', space=smem, size = 0x4, offset = 0x4, fixed_abs, tag = 'smem constant byte address 0x4 - core index']
  #allocation1 [shape = 'u32[144,128]{1,0:T(1,128)}', space=vmem, size = 0x12000, scoped, tag = 'internal scratch']
  #allocation2 [shape = 'f32[32,1]{1,0:T(8,128)}', space=vmem, size = 0x4000, scoped, tag = 'scratch operand']
  #allocation3 [shape = 'f32[32,1]{1,0:T(8,128)}', space=vmem, size = 0x4000, scoped, tag = 'scratch operand']
  %s0 = inlined_call_operand.hbm [shape: f32[64,256], index: 0, kind: input, shape index: {}]
  %s1 = inlined_call_operand.vmem [shape: f32[64,2], index: 1, kind: input, shape index: {}]
  %s2 = inlined_call_operand.vmem [shape: f32[64,1], index: 2, kind: output, shape index: {}]
  %s3 = sld [smem:[#allocation0]]
  $region53: #{tpu_custom_call.1} parent=0
    _
  %s5 = ssub.s32 1, %s3
  %s6 = scalar_select 0, %s5, %s3
  $region1: #{tpu_custom_call.1} parent=0
    #allocation4 [shape = 'u8[65536]{0}', space=vmem, size = 0x10000, scoped, tag = 'input window, operand 0']
    #allocation5 [shape = 's32[2]{0}', space=sflag, size = 0x8, scoped, tag = 'scoped memory for tpu_custom_call.1']
    %7 = vsyncpa [#allocation5], 0
    %s8 = scalar_lea.sflag [#allocation5], 1
    %9 = vsyncpa %s8, 0
    loop: start=0, step=1, limit=4
    $region2: #{tpu_custom_call.1} parent=1 // loop_pre_header
      _
    $region3: #{tpu_custom_call.1} parent=1 // loop_header
      %s11 = sphi 0, %s15
      %p12 = scmp.ge.s32.totalorder %s11, 4
      %s18 = sphi 0, %s30
      %s19 = sphi 0, %s26
      %s20 = sphi 0, %s18
      %s21 = sphi 0, %s19
      %s22 = sphi 0, %s20
      %s23 = sphi 0, %s21
      %s35 = sphi 0, %s37
      %s38 = sphi 0, %s35
      %s39 = sphi 0, %s38
      %s55 = sphi 0, %s39
      %s61 = sphi 0, %s63
      %s64 = sphi 0, %s61
      %s65 = sphi 0, %s64
      %s81 = sphi 0, %s65
      %s87 = sphi 0, %s89
      %s90 = sphi 0, %s87
      %s91 = sphi 0, %s90
      %s107 = sphi 0, %s91
    $region4: #{tpu_custom_call.1} parent=1 // loop_header_branch
      %14 = sbr.rel (%p12) target = $region8
    $region5: #{tpu_custom_call.1} parent=1 // loop_body
      %s16 = ssub.s32 %s11, 1
      %s17 = ssub.s32 %s11, 2
      %s24 = sadd.s32 1, %s19
      %p25 = scmp.ge.s32.totalorder %s24, 1
      %s26 = scalar_select %p25, 0, %s24
      %s27 = sadd.s32 1, %s18
      %s28 = scalar_select %p25, %s27, %s18
      %p29 = scmp.ge.s32.totalorder %s28, 2
      %s30 = scalar_select %p29, 0, %s28
      %s31 = ssub.s32 %s18, %s30
      %s32 = ssub.s32 %s19, %s26
      %s33 = sor.u32 %s31, %s32
      %p34 = scmp.eq.s32.totalorder %s33, 0
      %s36 = sadd.s32 %s35, 1
      %s37 = scalar_select %p34, %s35, %s36
      %p40 = pneg %p34
      %p41 = scmp.eq.s32.totalorder %s11, 1
      %p42 = por %p40, %p41
      %p43 = scmp.ne.s32.totalorder %s35, %s38
      %p44 = scmp.eq.s32.totalorder %s11, 0
      %p45 = por %p43, %p44
      %p46 = scmp.ne.s32.totalorder %s35, %s38
      %p47 = scmp.eq.s32.totalorder %s16, 1
      %p48 = por %p46, %p47
      %p49 = scmp.ne.s32.totalorder %s38, %s39
      %p50 = scmp.eq.s32.totalorder %s16, 0
      %p51 = por %p49, %p50
      %p52 = scmp.ne.s32.totalorder %s38, %s39
      %p53 = scmp.eq.s32.totalorder %s17, 1
      %p54 = por %p52, %p53
      %p56 = scmp.ne.s32.totalorder %s39, %s55
      %p57 = scmp.eq.s32.totalorder %s17, 0
      %p58 = por %p56, %p57
      %s59 = ssub.s32 %s18, %s30
      %p60 = scmp.eq.s32.totalorder %s59, 0
      %s62 = sadd.s32 %s61, 1
      %s63 = scalar_select %p60, %s61, %s62
      %p66 = pneg %p60
      %p67 = scmp.eq.s32.totalorder %s11, 1
      %p68 = por %p66, %p67
      %p69 = scmp.ne.s32.totalorder %s61, %s64
      %p70 = scmp.eq.s32.totalorder %s11, 0
      %p71 = por %p69, %p70
      %p72 = scmp.ne.s32.totalorder %s61, %s64
      %p73 = scmp.eq.s32.totalorder %s16, 1
      %p74 = por %p72, %p73
      %p75 = scmp.ne.s32.totalorder %s64, %s65
      %p76 = scmp.eq.s32.totalorder %s16, 0
      %p77 = por %p75, %p76
      %p78 = scmp.ne.s32.totalorder %s64, %s65
      %p79 = scmp.eq.s32.totalorder %s17, 1
      %p80 = por %p78, %p79
      %p82 = scmp.ne.s32.totalorder %s65, %s81
      %p83 = scmp.eq.s32.totalorder %s17, 0
      %p84 = por %p82, %p83
      %s85 = ssub.s32 %s18, %s30
      %p86 = scmp.eq.s32.totalorder %s85, 0
      %s88 = sadd.s32 %s87, 1
      %s89 = scalar_select %p86, %s87, %s88
      %p92 = pneg %p86
      %p93 = scmp.eq.s32.totalorder %s11, 1
      %p94 = por %p92, %p93
      %p95 = scmp.ne.s32.totalorder %s87, %s90
      %p96 = scmp.eq.s32.totalorder %s11, 0
      %p97 = por %p95, %p96
      %p98 = scmp.ne.s32.totalorder %s87, %s90
      %p99 = scmp.eq.s32.totalorder %s16, 1
      %p100 = por %p98, %p99
      %p101 = scmp.ne.s32.totalorder %s90, %s91
      %p102 = scmp.eq.s32.totalorder %s16, 0
      %p103 = por %p101, %p102
      %p104 = scmp.ne.s32.totalorder %s90, %s91
      %p105 = scmp.eq.s32.totalorder %s17, 1
      %p106 = por %p104, %p105
      %p108 = scmp.ne.s32.totalorder %s91, %s107
      %p109 = scmp.eq.s32.totalorder %s17, 0
      %p110 = por %p108, %p109
      %p111 = scmp.le.s32.totalorder 1, %s11
      %p112 = scmp.lt.s32.totalorder %s11, 3
      %p113 = pnand %p111, %p112
      %p114 = pneg %p113
      // Predicated region
      $region9: #{tpu_custom_call.1} parent=5 // pred_check
        _
      $region10: #{tpu_custom_call.1} parent=5 // pred_check_branch
        %116 = sbr.rel (%p113) target = $region12
      $region11: #{tpu_custom_call.1} parent=5 // pred_region
        %s117 = ssub.s32 %s11, 1
      $region12: #{tpu_custom_call.1} parent=5 // pred_fallthru
        _
      %p118 = scmp.lt.s32.totalorder %s11, 2
      // Predicated region
      $region13: #{tpu_custom_call.1} parent=5 // pred_check
        %p119 = pneg %p118
      $region14: #{tpu_custom_call.1} parent=5 // pred_check_branch
        %121 = sbr.rel (%p119) target = $region16
      $region15: #{tpu_custom_call.1} parent=5 // pred_region
        // Predicated region
        $region17: #{tpu_custom_call.1} parent=15 // pred_check
          %p122 = pneg %p45
        $region18: #{tpu_custom_call.1} parent=15 // pred_check_branch
          %124 = sbr.rel (%p122) target = $region20
        $region19: #{tpu_custom_call.1} parent=15 // pred_region
          %s125 = sand.u32 %s35, 1
          %s126 = scalar_lea.sflag [#allocation5], %s125
          %s127 = sand.u32 %s35, 1
          %s128 = smul.addr %s127, 64
          %s129 = scalar_lea.vmem [#allocation4], %s128
          %s130 = smul.u32 4, %s18
          %s131 = smul.u32 2, %s19
          %s133 = ssub.s32 1024, 1024
          %134 = vsyncadd %s126, %s133
          %s135 = smul.addr %s130, 2
          %s136 = sadd.s32 %s131, %s135
          %s137 = smul.addr %s136, 128
          %s138 = scalar_lea.hbm %s0, %s137
          %s139 = sshll.u32 %s129, 4
          %s140 = int_to_ptr.vmem [resolvable:$true] %s139
          %145 = dma.hbm_to_vmem [thread:$0]  %s138, 1024, %s140, %s126, 256, 256, 16
        $region20: #{tpu_custom_call.1} parent=15 // pred_fallthru
          _
        // Predicated region
        $region21: #{tpu_custom_call.1} parent=15 // pred_check
          %p146 = pneg %p71
        $region22: #{tpu_custom_call.1} parent=15 // pred_check_branch
          %148 = sbr.rel (%p146) target = $region24
        $region23: #{tpu_custom_call.1} parent=15 // pred_region
          %s149 = smul.u32 4, %s18
          %p150 = scmp.lt.s32.totalorder %s149, 7
          %s151 = scalar_select %p150, %s149, 7
          %s152 = smul.addr %s151, 8
          %s153 = scalar_lea.vmem %s1, %s152
          %s154 = smul.u32 4, %s18
        $region24: #{tpu_custom_call.1} parent=15 // pred_fallthru
          _
      $region16: #{tpu_custom_call.1} parent=5 // pred_fallthru
        _
      %p155 = scmp.le.s32.totalorder 1, %s11
      %p156 = scmp.lt.s32.totalorder %s11, 3
      %p157 = pnand %p155, %p156
      %p158 = pneg %p157
      // Predicated region
      $region25: #{tpu_custom_call.1} parent=5 // pred_check
        _
      $region26: #{tpu_custom_call.1} parent=5 // pred_check_branch
        %160 = sbr.rel (%p157) target = $region28
      $region27: #{tpu_custom_call.1} parent=5 // pred_region
        %s161 = ssub.s32 %s11, 1
        %s162 = sand.u32 %s38, 1
        %s163 = scalar_lea.sflag [#allocation5], %s162
        %s164 = sand.u32 %s38, 1
        %s165 = smul.addr %s164, 64
        %s166 = scalar_lea.vmem [#allocation4], %s165
        // Predicated region
        $region29: #{tpu_custom_call.1} parent=27 // pred_check
          %p167 = pneg %p51
        $region30: #{tpu_custom_call.1} parent=27 // pred_check_branch
          %169 = sbr.rel (%p167) target = $region32
        $region31: #{tpu_custom_call.1} parent=27 // pred_region
          %170 = dma.done %s163, 1024
        $region32: #{tpu_custom_call.1} parent=27 // pred_fallthru
          _
        %s171 = sand.u32 %s38, 1
        %s172 = scalar_lea.sflag [#allocation5], %s171
        %s173 = sand.u32 %s38, 1
        %s174 = smul.addr %s173, 64
        %s175 = scalar_lea.vmem [#allocation4], %s174
        %p176 = pneg %p51
        %p177 = pneg %p48
        %s178 = smul.u32 4, %s20
        %p179 = scmp.lt.s32.totalorder %s178, 7
        %s180 = scalar_select %p179, %s178, 7
        %s181 = smul.addr %s180, 8
        %s182 = scalar_lea.vmem %s1, %s181
        %p183 = pneg %p77
        %p184 = pneg %p74
        %p185 = pneg %p103
        %p186 = pneg %p100
        %s187 = smul.u32 4, %s20
        %p188 = scmp.lt.s32.totalorder %s187, 7
        %s189 = scalar_select %p188, %s187, 7
        %s190 = smul.addr %s189, 8
        %s191 = scalar_lea.vmem %s2, %s190
        %s192 = smul.u32 4, %s20
        %s193 = smul.u32 2, %s21
        %s194 = smul.u32 4, %s20
        %p195 = scmp.lt.s32.totalorder %s194, 7
        %s196 = scalar_select %p195, %s194, 7
        %s197 = smul.addr %s196, 8
        %s198 = scalar_lea.vmem %s1, %s197
        %s199 = smul.u32 4, %s20
        %s200 = smul.u32 4, %s20
        %p201 = scmp.lt.s32.totalorder %s200, 7
        %s202 = scalar_select %p201, %s200, 7
        %s203 = smul.addr %s202, 8
        %s204 = scalar_lea.vmem %s2, %s203
        %s205 = smul.u32 4, %s20
        %p206 = scmp.eq.s32.totalorder %s21, 0
        // Predicated region
        $region33: #{tpu_custom_call.1} parent=27 // pred_check
          %p207 = pneg %p206
        $region34: #{tpu_custom_call.1} parent=27 // pred_check_branch
          %209 = sbr.rel (%p207) target = $region36
        $region35: #{tpu_custom_call.1} parent=27 // pred_region
          %vm210 = vcmask 7168
          %211 = vst.msk [vmem:[#allocation2] sm:$0xff] %vm210, 0.0
          %212 = vst.msk [vmem:[#allocation2 + $0x8] sm:$0xff] %vm210, 0.0
          %213 = vst.msk [vmem:[#allocation2 + $0x10] sm:$0xff] %vm210, 0.0
          %214 = vst.msk [vmem:[#allocation2 + $0x18] sm:$0xff] %vm210, 0.0
          %215 = vst.msk [vmem:[#allocation3] sm:$0xff] %vm210, -inf
          %216 = vst.msk [vmem:[#allocation3 + $0x8] sm:$0xff] %vm210, -inf
          %217 = vst.msk [vmem:[#allocation3 + $0x10] sm:$0xff] %vm210, -inf
          %218 = vst.msk [vmem:[#allocation3 + $0x18] sm:$0xff] %vm210, -inf
        $region36: #{tpu_custom_call.1} parent=27 // pred_fallthru
          _
        %v219 = vld [vmem:[%s166] sm:$0xff]
        %v220 = vld [vmem:[%s166 + $0x8] sm:$0xff]
        %v221 = vld [vmem:[%s166 + $0x10] sm:$0xff]
        %v222 = vld [vmem:[%s166 + $0x18] sm:$0xff]
        %v223 = vld [vmem:[%s166 + $0x20] sm:$0xff]
        %v224 = vld [vmem:[%s166 + $0x28] sm:$0xff]
        %v225 = vld [vmem:[%s166 + $0x30] sm:$0xff]
        %v226 = vld [vmem:[%s166 + $0x38] sm:$0xff]
        %v227 = vld [vmem:[#allocation2] sm:$0xff]
        %v228 = vld [vmem:[#allocation2 + $0x8] sm:$0xff]
        %v229 = vld [vmem:[#allocation2 + $0x10] sm:$0xff]
        %v230 = vld [vmem:[#allocation2 + $0x18] sm:$0xff]
        %v231 = vadd.f32 %v219, %v220
        %232 = vadd.xlane.f32.xlu0 %v231
        %v233 = vpop.xlane.xlu0 %232
        %v234 = vadd.f32 %v221, %v222
        %235 = vadd.xlane.f32.xlu0 %v234
        %v236 = vpop.xlane.xlu0 %235
        %v237 = vadd.f32 %v223, %v224
        %238 = vadd.xlane.f32.xlu0 %v237
        %v239 = vpop.xlane.xlu0 %238
        %v240 = vadd.f32 %v225, %v226
        %241 = vadd.xlane.f32.xlu0 %v240
        %v242 = vpop.xlane.xlu0 %241
        %v243 = vadd.f32 %v227, %v233
        %v244 = vadd.f32 %v228, %v236
        %v245 = vadd.f32 %v229, %v239
        %v246 = vadd.f32 %v230, %v242
        %vm247 = vcmask 7168
        %248 = vst.msk [vmem:[#allocation2] sm:$0xff] %vm247, %v243
        %249 = vst.msk [vmem:[#allocation2 + $0x8] sm:$0xff] %vm247, %v244
        %250 = vst.msk [vmem:[#allocation2 + $0x10] sm:$0xff] %vm247, %v245
        %251 = vst.msk [vmem:[#allocation2 + $0x18] sm:$0xff] %vm247, %v246
        %v252 = vld [vmem:[#allocation3] sm:$0xff]
        %v253 = vld [vmem:[#allocation3 + $0x8] sm:$0xff]
        %v254 = vld [vmem:[#allocation3 + $0x10] sm:$0xff]
        %v255 = vld [vmem:[#allocation3 + $0x18] sm:$0xff]
        %v256 = vmax.f32 %v219, %v220
        %257 = vmax.xlane.f32.xlu0 %v256
        %v258 = vpop.xlane.xlu0 %257
        %v259 = vmax.f32 %v221, %v222
        %260 = vmax.xlane.f32.xlu0 %v259
        %v261 = vpop.xlane.xlu0 %260
        %v262 = vmax.f32 %v223, %v224
        %263 = vmax.xlane.f32.xlu0 %v262
        %v264 = vpop.xlane.xlu0 %263
        %v265 = vmax.f32 %v225, %v226
        %266 = vmax.xlane.f32.xlu0 %v265
        %v267 = vpop.xlane.xlu0 %266
        %v268 = vmax.f32 %v252, %v258
        %v269 = vmax.f32 %v253, %v261
        %v270 = vmax.f32 %v254, %v264
        %v271 = vmax.f32 %v255, %v267
        %272 = vst.msk [vmem:[#allocation3] sm:$0xff] %vm247, %v268
        %273 = vst.msk [vmem:[#allocation3 + $0x8] sm:$0xff] %vm247, %v269
        %274 = vst.msk [vmem:[#allocation3 + $0x10] sm:$0xff] %vm247, %v270
        %275 = vst.msk [vmem:[#allocation3 + $0x18] sm:$0xff] %vm247, %v271
        // Predicated region
        $region37: #{tpu_custom_call.1} parent=27 // pred_check
          %p276 = pneg %p206
        $region38: #{tpu_custom_call.1} parent=27 // pred_check_branch
          %278 = sbr.rel (%p276) target = $region40
        $region39: #{tpu_custom_call.1} parent=27 // pred_region
          %v279 = vld [vmem:[%s198] sm:$0xff]
          %v280 = vld [vmem:[%s198 + $0x8] sm:$0xff]
          %v281 = vld [vmem:[%s198 + $0x10] sm:$0xff]
          %v282 = vld [vmem:[%s198 + $0x18] sm:$0xff]
          %v283 = vld [vmem:[#allocation2] sm:$0xff]
          %v284 = vld [vmem:[#allocation2 + $0x8] sm:$0xff]
          %v285 = vld [vmem:[#allocation2 + $0x10] sm:$0xff]
          %v286 = vld [vmem:[#allocation2 + $0x18] sm:$0xff]
          %v287 = vmul.f32 %v283, 0.00390625
          %v288 = vmul.f32 %v284, 0.00390625
          %v289 = vmul.f32 %v285, 0.00390625
          %v290 = vmul.f32 %v286, 0.00390625
          %v291 = vmul.f32 %v279, %v287
          %v292 = vmul.f32 %v280, %v288
          %v293 = vmul.f32 %v281, %v289
          %v294 = vmul.f32 %v282, %v290
          %v295 = vld [vmem:[#allocation3] sm:$0xff]
          %v296 = vld [vmem:[#allocation3 + $0x8] sm:$0xff]
          %v297 = vld [vmem:[#allocation3 + $0x10] sm:$0xff]
          %v298 = vld [vmem:[#allocation3 + $0x18] sm:$0xff]
          %303 = vrot.lane.b32.xlu0 %v295, 1
          %v304 = vpop.permute.xlu0 %303
          %305 = vrot.lane.b32.xlu0 %v296, 1
          %v306 = vpop.permute.xlu0 %305
          %307 = vrot.lane.b32.xlu0 %v297, 1
          %v308 = vpop.permute.xlu0 %307
          %309 = vrot.lane.b32.xlu0 %v298, 1
          %v310 = vpop.permute.xlu0 %309
          %v315 = vmul.f32 %v279, %v304
          %v316 = vmul.f32 %v280, %v306
          %v317 = vmul.f32 %v281, %v308
          %v318 = vmul.f32 %v282, %v310
          %323 = vrot.lane.b32.xlu0 %v315, 127
          %v324 = vpop.permute.xlu0 %323
          %325 = vrot.lane.b32.xlu0 %v316, 127
          %v326 = vpop.permute.xlu0 %325
          %327 = vrot.lane.b32.xlu0 %v317, 127
          %v328 = vpop.permute.xlu0 %327
          %329 = vrot.lane.b32.xlu0 %v318, 127
          %v330 = vpop.permute.xlu0 %329
          %v335 = vadd.f32 %v291, %v324
          %v336 = vadd.f32 %v292, %v326
          %v337 = vadd.f32 %v293, %v328
          %v338 = vadd.f32 %v294, %v330
          %v339 = vxor.u32 %v335, 2147483648
          %v340 = vxor.u32 %v336, 2147483648
          %v341 = vxor.u32 %v337, 2147483648
          %v342 = vxor.u32 %v338, 2147483648
          %v343 = vmul.f32 %v339, 1.442695
          %v344 = vpow.pop %v343
          %v345 = vmul.f32 %v340, 1.442695
          %v346 = vpow.pop %v345
          %v347 = vmul.f32 %v341, 1.442695
          %v348 = vpow.pop %v347
          %v349 = vmul.f32 %v342, 1.442695
          %v350 = vpow.pop %v349
          %v351 = vadd.f32 %v344, 1.0
          %v352 = vadd.f32 %v346, 1.0
          %v353 = vadd.f32 %v348, 1.0
          %v354 = vadd.f32 %v350, 1.0
          %v355 = vrcp.pop %v351
          %v356 = vmul.f32 1.0, %v355
          %v357 = vrcp.pop %v352
          %v358 = vmul.f32 1.0, %v357
          %v359 = vrcp.pop %v353
          %v360 = vmul.f32 1.0, %v359
          %v361 = vrcp.pop %v354
          %v362 = vmul.f32 1.0, %v361
          %363 = vst.msk [vmem:[%s204] sm:$0xff] %vm247, %v356
          %364 = vst.msk [vmem:[%s204 + $0x8] sm:$0xff] %vm247, %v358
          %365 = vst.msk [vmem:[%s204 + $0x10] sm:$0xff] %vm247, %v360
          %366 = vst.msk [vmem:[%s204 + $0x18] sm:$0xff] %vm247, %v362
        $region40: #{tpu_custom_call.1} parent=27 // pred_fallthru
          _
        %s367 = smul.u32 4, %s20
        %p368 = scmp.lt.s32.totalorder %s367, 7
        %s369 = scalar_select %p368, %s367, 7
        %s370 = smul.addr %s369, 8
        %s371 = scalar_lea.vmem %s2, %s370
        // Predicated region
        $region41: #{tpu_custom_call.1} parent=27 // pred_check
          %p372 = pneg %p100
        $region42: #{tpu_custom_call.1} parent=27 // pred_check_branch
          %374 = sbr.rel (%p372) target = $region44
        $region43: #{tpu_custom_call.1} parent=27 // pred_region
          %s375 = smul.u32 4, %s20
        $region44: #{tpu_custom_call.1} parent=27 // pred_fallthru
          _
      $region28: #{tpu_custom_call.1} parent=5 // pred_fallthru
        _
      %p376 = scmp.le.s32.totalorder 2, %s11
      // Predicated region
      $region45: #{tpu_custom_call.1} parent=5 // pred_check
        %p377 = pneg %p376
      $region46: #{tpu_custom_call.1} parent=5 // pred_check_branch
        %379 = sbr.rel (%p377) target = $region48
      $region47: #{tpu_custom_call.1} parent=5 // pred_region
        %s380 = ssub.s32 %s11, 2
        // Predicated region
        $region49: #{tpu_custom_call.1} parent=47 // pred_check
          %p381 = pneg %p106
        $region50: #{tpu_custom_call.1} parent=47 // pred_check_branch
          %383 = sbr.rel (%p381) target = $region52
        $region51: #{tpu_custom_call.1} parent=47 // pred_region
          %s384 = smul.u32 4, %s22
          %p385 = scmp.lt.s32.totalorder %s384, 7
          %s386 = scalar_select %p385, %s384, 7
          %s387 = smul.addr %s386, 8
          %s388 = scalar_lea.vmem %s2, %s387
        $region52: #{tpu_custom_call.1} parent=47 // pred_fallthru
          _
      $region48: #{tpu_custom_call.1} parent=5 // pred_fallthru
        _
    $region6: #{tpu_custom_call.1} parent=1 // loop_footer
      %s15 = sadd.s32 1, %s11
    $region7: #{tpu_custom_call.1} parent=1 // loop_footer_branch
      %10 = sbr.rel target = $region3
    $region8: #{tpu_custom_call.1} parent=1 // loop_exit
      _
    %389 = vsyncpa [#allocation5], 1
    %s390 = scalar_lea.sflag [#allocation5], 1
    %391 = vsyncpa %s390, 1

</llo_original>
